<compile_context>
chip_gen: v5e
topology: v5e:2x2
jax: 0.10.0
libtpu: 0.0.40
codegen_flags: <defaults>
</compile_context>

<pallas_src>
import functools

import jax
import jax.numpy as jnp
from jax import lax
from jax.experimental import pallas as pl
from jax.experimental.pallas import tpu as pltpu


def _spatial_attn_kernel(w_ref, x_ref, o_ref, mx_ref, sm_ref):
    # w_ref : SMEM (18,) f32  -- conv weight (out=1, in=2, kh=3, kw=3) flattened;
    #         the mean-channel taps are pre-scaled by 1/C in the wrapper.
    # x_ref : VMEM (1, Ct, H, W)  -- one channel chunk of one batch element.
    # o_ref : VMEM (1, 1, H, W)   -- attention map (written on the last chunk).
    # mx_ref, sm_ref : VMEM (H, W) f32 scratch -- running channel max / sum.
    c_idx = pl.program_id(1)
    n_c = pl.num_programs(1)

    xc = x_ref[0].astype(jnp.float32)            # (Ct, H, W), compute in f32
    H, W = xc.shape[1], xc.shape[2]

    @pl.when(c_idx == 0)
    def _():
        mx_ref[...] = jnp.full((H, W), -jnp.inf, jnp.float32)
        sm_ref[...] = jnp.zeros((H, W), jnp.float32)

    mx_ref[...] = jnp.maximum(mx_ref[...], jnp.max(xc, axis=0))
    sm_ref[...] = sm_ref[...] + jnp.sum(xc, axis=0)

    @pl.when(c_idx == n_c - 1)
    def _():
        x1 = mx_ref[...]                         # channel max
        x2 = sm_ref[...]                         # channel sum (weights carry 1/C)

        # Hoisted separable zero-padding masks: 3 row + 3 col edge masks,
        # combined into 9 tap masks (None == all-valid), reused for both channels.
        row = lax.broadcasted_iota(jnp.int32, (H, W), 0)
        col = lax.broadcasted_iota(jnp.int32, (H, W), 1)

        def _edge(iota, d, size):
            if d == 0:
                return None
            return ((iota + d >= 0) & (iota + d < size)).astype(jnp.float32)

        rmasks = [_edge(row, dy, H) for dy in (-1, 0, 1)]
        cmasks = [_edge(col, dx, W) for dx in (-1, 0, 1)]
        masks = []
        for rm in rmasks:
            for cm in cmasks:
                if rm is None:
                    masks.append(cm)
                elif cm is None:
                    masks.append(rm)
                else:
                    masks.append(rm * cm)

        acc = jnp.zeros((H, W), jnp.float32)
        for c, plane in enumerate((x1, x2)):
            # Factored rolls: rows once (dy = -1, 0, +1), then lane rolls per row
            # plane (dx = -1, 0, +1).  shift = (-d) % dim emulates the padding shift.
            rows = (pltpu.roll(plane, 1, 0), plane, pltpu.roll(plane, H - 1, 0))
            for ky in range(3):
                rp = rows[ky]
                cols = (pltpu.roll(rp, 1, 1), rp, pltpu.roll(rp, W - 1, 1))
                for kx in range(3):
                    t = ky * 3 + kx
                    wv = w_ref[c * 9 + t]
                    m = masks[t]
                    tap = cols[kx] if m is None else cols[kx] * m
                    acc = acc + wv * tap

        o_ref[0, 0] = jax.nn.sigmoid(acc).astype(o_ref.dtype)


def _pick_channel_chunk(C, H, W, itemsize, budget_bytes=8 << 20):
    """Largest divisor of C whose double-buffered (Ct, H, W) input block fits budget."""
    per_chan = 2 * H * W * itemsize              # double buffered
    max_ct = max(1, budget_bytes // per_chan)
    ct = min(C, int(max_ct))
    while C % ct != 0:
        ct -= 1
    return ct


@functools.partial(jax.jit, static_argnames=("channel_chunk",))
def spatial_attention(x, weight, *, channel_chunk=None):
    """SpatialAttentionModule forward.

    x: (N, C, H, W) float32 or bfloat16; weight: (1, 2, 3, 3) -> (N, 1, H, W) in x.dtype.
    """
    N, C, H, W = x.shape
    itemsize = jnp.dtype(x.dtype).itemsize

    # Fold 1/C of the channel mean into the mean-channel (index 1) conv weights.
    w = weight.astype(jnp.float32)
    w = w.at[:, 1].multiply(1.0 / C)
    w_flat = w.reshape(-1)                        # (18,)

    if channel_chunk is None:
        ct = _pick_channel_chunk(C, H, W, itemsize)
    else:
        if C % channel_chunk != 0:
            raise ValueError("channel_chunk must divide C")
        ct = channel_chunk
    n_chunks = C // ct

    # VMEM budget: input double-buffer + output double-buffer + 2 scratch planes,
    # with headroom, capped comfortably below v7x's 64 MiB physical VMEM.
    vmem_needed = 2 * ct * H * W * itemsize + 2 * H * W * itemsize + 2 * H * W * 4
    vmem_limit = int(min(max(4 * vmem_needed, 16 << 20), 48 << 20))

    cost = pl.CostEstimate(
        flops=int(N * H * W * (2 * C + 4 * 9)),           # reductions + 3x3 conv
        transcendentals=int(N * H * W),                    # sigmoid
        bytes_accessed=int(N * C * H * W * itemsize + N * H * W * itemsize + 18 * 4),
    )

    return pl.pallas_call(
        _spatial_attn_kernel,
        out_shape=jax.ShapeDtypeStruct((N, 1, H, W), x.dtype),
        grid_spec=pltpu.PrefetchScalarGridSpec(
            num_scalar_prefetch=0,
            grid=(N, n_chunks),
            in_specs=[
                pl.BlockSpec(memory_space=pltpu.MemorySpace.SMEM),          # weights
                pl.BlockSpec((1, ct, H, W), lambda n, c: (n, c, 0, 0)),     # input chunk
            ],
            out_specs=pl.BlockSpec((1, 1, H, W), lambda n, c: (n, 0, 0, 0)),
            scratch_shapes=[
                pltpu.VMEM((H, W), jnp.float32),   # running channel max
                pltpu.VMEM((H, W), jnp.float32),   # running channel sum
            ],
        ),
        compiler_params=pltpu.CompilerParams(
            dimension_semantics=("parallel", "arbitrary"),
            vmem_limit_bytes=vmem_limit,
        ),
        cost_estimate=cost,
    )(w_flat, x)


def _reference(x, weight):
    x1 = jnp.max(x, axis=1, keepdims=True)
    x2 = jnp.mean(x, axis=1, keepdims=True)
    xc = jnp.concatenate([x1, x2], axis=1)                       # (N, 2, H, W)
    y = lax.conv_general_dilated(
        xc, weight, window_strides=(1, 1), padding=((1, 1), (1, 1)),
        dimension_numbers=("NCHW", "OIHW", "NCHW"))
    return jax.nn.sigmoid(y)


if __name__ == "__main__":
    key = jax.random.PRNGKey(0)
    k_x, k_w = jax.random.split(key)

    N, C, H, W = 2, 4, 16, 16
    x = jax.random.normal(k_x, (N, C, H, W), dtype=jnp.float32)

    # conv3x3(2, 1), kaiming_normal_(fan_in, relu): std = sqrt(2 / fan_in), fan_in = 2*3*3
    fan_in = 2 * 3 * 3
    weight = jax.random.normal(k_w, (1, 2, 3, 3), dtype=jnp.float32) * jnp.sqrt(2.0 / fan_in)

    ref = _reference(x, weight)

    # 1) f32, default (single channel chunk)
    out = jax.block_until_ready(spatial_attention(x, weight))
    assert out.shape == (N, 1, H, W)
    assert jnp.allclose(out, ref, atol=1e-5, rtol=1e-5), float(jnp.max(jnp.abs(out - ref)))

    # 2) f32, forced multi-chunk channel reduction (exercises the scratch accumulator path)
    out2 = jax.block_until_ready(spatial_attention(x, weight, channel_chunk=2))
    assert jnp.allclose(out2, ref, atol=1e-5, rtol=1e-5), float(jnp.max(jnp.abs(out2 - ref)))

    # 3) bf16 activations: half the HBM traffic, f32 compute inside the kernel
    out_bf16 = jax.block_until_ready(spatial_attention(x.astype(jnp.bfloat16), weight))
    assert out_bf16.dtype == jnp.bfloat16
    assert jnp.allclose(out_bf16.astype(jnp.float32), ref, atol=5e-2), \
        float(jnp.max(jnp.abs(out_bf16.astype(jnp.float32) - ref)))

    print("KERNEL_OK")
</pallas_src>

<mosaic_0001>
module attributes {stable_mosaic.version = 11 : i64} {
  func.func @_spatial_attn_kernel(%arg0: i32, %arg1: i32, %arg2: memref<18xf32, #tpu.memory_space<smem>>, %arg3: memref<1x4x16x16xf32, #tpu.memory_space<vmem>>, %arg4: memref<1x1x16x16xf32, #tpu.memory_space<vmem>>, %arg5: memref<16x16xf32, #tpu.memory_space<vmem>>, %arg6: memref<16x16xf32, #tpu.memory_space<vmem>>) attributes {dimension_semantics = [#tpu.dimension_semantics<parallel>, #tpu.dimension_semantics<arbitrary>], iteration_bounds = array<i64: 2, 1>, scalar_prefetch = 0 : i64, scratch_operands = 2 : i64, tpu.core_type = #tpu.core_type<tc>, window_params = [{transform_indices = @transform_0, window_bounds = array<i64: 18>}, {transform_indices = @transform_1, window_bounds = array<i64: 1, 4, 16, 16>}, {transform_indices = @transform_2, window_bounds = array<i64: 1, 1, 16, 16>}]} {
    %c0 = arith.constant 0 : index
    %c0_0 = arith.constant 0 : index
    %c0_1 = arith.constant 0 : index
    %c0_2 = arith.constant 0 : index
    %0 = vector.load %arg3[%c0, %c0_0, %c0_1, %c0_2] : memref<1x4x16x16xf32, #tpu.memory_space<vmem>>, vector<1x4x16x16xf32>
    %1 = vector.shape_cast %0 : vector<1x4x16x16xf32> to vector<4x16x16xf32>
    %c0_i32 = arith.constant 0 : i32
    %2 = arith.cmpi eq, %arg1, %c0_i32 : i32
    %3 = arith.extui %2 : i1 to i32
    %c0_i32_3 = arith.constant 0 : i32
    %4 = arith.cmpi ne, %3, %c0_i32_3 : i32
    scf.if %4 {
      %cst_15 = arith.constant 0xFF800000 : f32
      %16 = vector.broadcast %cst_15 : f32 to vector<16x16xf32>
      %c0_16 = arith.constant 0 : index
      %c0_17 = arith.constant 0 : index
      %17 = vector.load %arg5[%c0_16, %c0_17] : memref<16x16xf32, #tpu.memory_space<vmem>>, vector<16x16xf32>
      tpu.vector_store %arg5[%c0_16, %c0_17], %16 {strides = array<i32>} : memref<16x16xf32, #tpu.memory_space<vmem>>, vector<16x16xf32>,
      %cst_18 = arith.constant 0.000000e+00 : f32
      %18 = vector.broadcast %cst_18 : f32 to vector<16x16xf32>
      %c0_19 = arith.constant 0 : index
      %c0_20 = arith.constant 0 : index
      %19 = vector.load %arg6[%c0_19, %c0_20] : memref<16x16xf32, #tpu.memory_space<vmem>>, vector<16x16xf32>
      tpu.vector_store %arg6[%c0_19, %c0_20], %18 {strides = array<i32>} : memref<16x16xf32, #tpu.memory_space<vmem>>, vector<16x16xf32>,
    } else {
    }
    %c0_4 = arith.constant 0 : index
    %c0_5 = arith.constant 0 : index
    %5 = vector.load %arg5[%c0_4, %c0_5] : memref<16x16xf32, #tpu.memory_space<vmem>>, vector<16x16xf32>
    %cst = arith.constant dense<0xFF800000> : vector<16x16xf32>
    %6 = vector.multi_reduction <maximumf>, %1, %cst [0] : vector<4x16x16xf32> to vector<16x16xf32>
    %7 = arith.maximumf %5, %6 : vector<16x16xf32>
    %c0_6 = arith.constant 0 : index
    %c0_7 = arith.constant 0 : index
    %8 = vector.load %arg5[%c0_6, %c0_7] : memref<16x16xf32, #tpu.memory_space<vmem>>, vector<16x16xf32>
    tpu.vector_store %arg5[%c0_6, %c0_7], %7 {strides = array<i32>} : memref<16x16xf32, #tpu.memory_space<vmem>>, vector<16x16xf32>,
    %c0_8 = arith.constant 0 : index
    %c0_9 = arith.constant 0 : index
    %9 = vector.load %arg6[%c0_8, %c0_9] : memref<16x16xf32, #tpu.memory_space<vmem>>, vector<16x16xf32>
    %cst_10 = arith.constant dense<0.000000e+00> : vector<16x16xf32>
    %10 = vector.multi_reduction <add>, %1, %cst_10 [0] : vector<4x16x16xf32> to vector<16x16xf32>
    %11 = arith.addf %9, %10 : vector<16x16xf32>
    %c0_11 = arith.constant 0 : index
    %c0_12 = arith.constant 0 : index
    %12 = vector.load %arg6[%c0_11, %c0_12] : memref<16x16xf32, #tpu.memory_space<vmem>>, vector<16x16xf32>
    tpu.vector_store %arg6[%c0_11, %c0_12], %11 {strides = array<i32>} : memref<16x16xf32, #tpu.memory_space<vmem>>, vector<16x16xf32>,
    %c0_i32_13 = arith.constant 0 : i32
    %13 = arith.cmpi eq, %arg1, %c0_i32_13 : i32
    %14 = arith.extui %13 : i1 to i32
    %c0_i32_14 = arith.constant 0 : i32
    %15 = arith.cmpi ne, %14, %c0_i32_14 : i32
    scf.if %15 {
      %c0_15 = arith.constant 0 : index
      %c0_16 = arith.constant 0 : index
      %16 = vector.load %arg5[%c0_15, %c0_16] : memref<16x16xf32, #tpu.memory_space<vmem>>, vector<16x16xf32>
      %c0_17 = arith.constant 0 : index
      %c0_18 = arith.constant 0 : index
      %17 = vector.load %arg6[%c0_17, %c0_18] : memref<16x16xf32, #tpu.memory_space<vmem>>, vector<16x16xf32>
      %18 = tpu.iota {dimensions = array<i32: 0>} : vector<16x16xi32>
      %19 = tpu.iota {dimensions = array<i32: 1>} : vector<16x16xi32>
      %c-1_i32 = arith.constant -1 : i32
      %20 = vector.broadcast %c-1_i32 : i32 to vector<16x16xi32>
      %21 = arith.addi %18, %20 : vector<16x16xi32>
      %c0_i32_19 = arith.constant 0 : i32
      %22 = vector.broadcast %c0_i32_19 : i32 to vector<16x16xi32>
      %23 = arith.cmpi sge, %21, %22 : vector<16x16xi32>
      %c-1_i32_20 = arith.constant -1 : i32
      %24 = vector.broadcast %c-1_i32_20 : i32 to vector<16x16xi32>
      %25 = arith.addi %18, %24 : vector<16x16xi32>
      %c16_i32 = arith.constant 16 : i32
      %26 = vector.broadcast %c16_i32 : i32 to vector<16x16xi32>
      %27 = arith.cmpi slt, %25, %26 : vector<16x16xi32>
      %28 = arith.andi %23, %27 : vector<16x16xi1>
      %29 = arith.extui %28 : vector<16x16xi1> to vector<16x16xi32>
      %30 = arith.sitofp %29 : vector<16x16xi32> to vector<16x16xf32>
      %c1_i32 = arith.constant 1 : i32
      %31 = vector.broadcast %c1_i32 : i32 to vector<16x16xi32>
      %32 = arith.addi %18, %31 : vector<16x16xi32>
      %c0_i32_21 = arith.constant 0 : i32
      %33 = vector.broadcast %c0_i32_21 : i32 to vector<16x16xi32>
      %34 = arith.cmpi sge, %32, %33 : vector<16x16xi32>
      %c1_i32_22 = arith.constant 1 : i32
      %35 = vector.broadcast %c1_i32_22 : i32 to vector<16x16xi32>
      %36 = arith.addi %18, %35 : vector<16x16xi32>
      %c16_i32_23 = arith.constant 16 : i32
      %37 = vector.broadcast %c16_i32_23 : i32 to vector<16x16xi32>
      %38 = arith.cmpi slt, %36, %37 : vector<16x16xi32>
      %39 = arith.andi %34, %38 : vector<16x16xi1>
      %40 = arith.extui %39 : vector<16x16xi1> to vector<16x16xi32>
      %41 = arith.sitofp %40 : vector<16x16xi32> to vector<16x16xf32>
      %c-1_i32_24 = arith.constant -1 : i32
      %42 = vector.broadcast %c-1_i32_24 : i32 to vector<16x16xi32>
      %43 = arith.addi %19, %42 : vector<16x16xi32>
      %c0_i32_25 = arith.constant 0 : i32
      %44 = vector.broadcast %c0_i32_25 : i32 to vector<16x16xi32>
      %45 = arith.cmpi sge, %43, %44 : vector<16x16xi32>
      %c-1_i32_26 = arith.constant -1 : i32
      %46 = vector.broadcast %c-1_i32_26 : i32 to vector<16x16xi32>
      %47 = arith.addi %19, %46 : vector<16x16xi32>
      %c16_i32_27 = arith.constant 16 : i32
      %48 = vector.broadcast %c16_i32_27 : i32 to vector<16x16xi32>
      %49 = arith.cmpi slt, %47, %48 : vector<16x16xi32>
      %50 = arith.andi %45, %49 : vector<16x16xi1>
      %51 = arith.extui %50 : vector<16x16xi1> to vector<16x16xi32>
      %52 = arith.sitofp %51 : vector<16x16xi32> to vector<16x16xf32>
      %c1_i32_28 = arith.constant 1 : i32
      %53 = vector.broadcast %c1_i32_28 : i32 to vector<16x16xi32>
      %54 = arith.addi %19, %53 : vector<16x16xi32>
      %c0_i32_29 = arith.constant 0 : i32
      %55 = vector.broadcast %c0_i32_29 : i32 to vector<16x16xi32>
      %56 = arith.cmpi sge, %54, %55 : vector<16x16xi32>
      %c1_i32_30 = arith.constant 1 : i32
      %57 = vector.broadcast %c1_i32_30 : i32 to vector<16x16xi32>
      %58 = arith.addi %19, %57 : vector<16x16xi32>
      %c16_i32_31 = arith.constant 16 : i32
      %59 = vector.broadcast %c16_i32_31 : i32 to vector<16x16xi32>
      %60 = arith.cmpi slt, %58, %59 : vector<16x16xi32>
      %61 = arith.andi %56, %60 : vector<16x16xi1>
      %62 = arith.extui %61 : vector<16x16xi1> to vector<16x16xi32>
      %63 = arith.sitofp %62 : vector<16x16xi32> to vector<16x16xf32>
      %64 = arith.mulf %30, %52 : vector<16x16xf32>
      %65 = arith.mulf %30, %63 : vector<16x16xf32>
      %66 = arith.mulf %41, %52 : vector<16x16xf32>
      %67 = arith.mulf %41, %63 : vector<16x16xf32>
      %cst_32 = arith.constant 0.000000e+00 : f32
      %68 = vector.broadcast %cst_32 : f32 to vector<16x16xf32>
      %c1_i32_33 = arith.constant 1 : i32
      %69 = tpu.dynamic_rotate %16 by %c1_i32_33 dim 0 : vector<16x16xf32>, i32 -> vector<16x16xf32>
      %c15_i32 = arith.constant 15 : i32
      %70 = tpu.dynamic_rotate %16 by %c15_i32 dim 0 : vector<16x16xf32>, i32 -> vector<16x16xf32>
      %c1_i32_34 = arith.constant 1 : i32
      %71 = tpu.dynamic_rotate %69 by %c1_i32_34 dim 1 : vector<16x16xf32>, i32 -> vector<16x16xf32>
      %c15_i32_35 = arith.constant 15 : i32
      %72 = tpu.dynamic_rotate %69 by %c15_i32_35 dim 1 : vector<16x16xf32>, i32 -> vector<16x16xf32>
      %c0_36 = arith.constant 0 : index
      %73 = memref.load %arg2[%c0_36] : memref<18xf32, #tpu.memory_space<smem>>
      %74 = arith.mulf %71, %64 : vector<16x16xf32>
      %75 = vector.broadcast %73 : f32 to vector<16x16xf32>
      %76 = arith.mulf %75, %74 : vector<16x16xf32>
      %77 = arith.addf %68, %76 : vector<16x16xf32>
      %c1 = arith.constant 1 : index
      %78 = memref.load %arg2[%c1] : memref<18xf32, #tpu.memory_space<smem>>
      %79 = arith.mulf %69, %30 : vector<16x16xf32>
      %80 = vector.broadcast %78 : f32 to vector<16x16xf32>
      %81 = arith.mulf %80, %79 : vector<16x16xf32>
      %82 = arith.addf %77, %81 : vector<16x16xf32>
      %c2 = arith.constant 2 : index
      %83 = memref.load %arg2[%c2] : memref<18xf32, #tpu.memory_space<smem>>
      %84 = arith.mulf %72, %65 : vector<16x16xf32>
      %85 = vector.broadcast %83 : f32 to vector<16x16xf32>
      %86 = arith.mulf %85, %84 : vector<16x16xf32>
      %87 = arith.addf %82, %86 : vector<16x16xf32>
      %c1_i32_37 = arith.constant 1 : i32
      %88 = tpu.dynamic_rotate %16 by %c1_i32_37 dim 1 : vector<16x16xf32>, i32 -> vector<16x16xf32>
      %c15_i32_38 = arith.constant 15 : i32
      %89 = tpu.dynamic_rotate %16 by %c15_i32_38 dim 1 : vector<16x16xf32>, i32 -> vector<16x16xf32>
      %c3 = arith.constant 3 : index
      %90 = memref.load %arg2[%c3] : memref<18xf32, #tpu.memory_space<smem>>
      %91 = arith.mulf %88, %52 : vector<16x16xf32>
      %92 = vector.broadcast %90 : f32 to vector<16x16xf32>
      %93 = arith.mulf %92, %91 : vector<16x16xf32>
      %94 = arith.addf %87, %93 : vector<16x16xf32>
      %c4 = arith.constant 4 : index
      %95 = memref.load %arg2[%c4] : memref<18xf32, #tpu.memory_space<smem>>
      %96 = vector.broadcast %95 : f32 to vector<16x16xf32>
      %97 = arith.mulf %96, %16 : vector<16x16xf32>
      %98 = arith.addf %94, %97 : vector<16x16xf32>
      %c5 = arith.constant 5 : index
      %99 = memref.load %arg2[%c5] : memref<18xf32, #tpu.memory_space<smem>>
      %100 = arith.mulf %89, %63 : vector<16x16xf32>
      %101 = vector.broadcast %99 : f32 to vector<16x16xf32>
      %102 = arith.mulf %101, %100 : vector<16x16xf32>
      %103 = arith.addf %98, %102 : vector<16x16xf32>
      %c1_i32_39 = arith.constant 1 : i32
      %104 = tpu.dynamic_rotate %70 by %c1_i32_39 dim 1 : vector<16x16xf32>, i32 -> vector<16x16xf32>
      %c15_i32_40 = arith.constant 15 : i32
      %105 = tpu.dynamic_rotate %70 by %c15_i32_40 dim 1 : vector<16x16xf32>, i32 -> vector<16x16xf32>
      %c6 = arith.constant 6 : index
      %106 = memref.load %arg2[%c6] : memref<18xf32, #tpu.memory_space<smem>>
      %107 = arith.mulf %104, %66 : vector<16x16xf32>
      %108 = vector.broadcast %106 : f32 to vector<16x16xf32>
      %109 = arith.mulf %108, %107 : vector<16x16xf32>
      %110 = arith.addf %103, %109 : vector<16x16xf32>
      %c7 = arith.constant 7 : index
      %111 = memref.load %arg2[%c7] : memref<18xf32, #tpu.memory_space<smem>>
      %112 = arith.mulf %70, %41 : vector<16x16xf32>
      %113 = vector.broadcast %111 : f32 to vector<16x16xf32>
      %114 = arith.mulf %113, %112 : vector<16x16xf32>
      %115 = arith.addf %110, %114 : vector<16x16xf32>
      %c8 = arith.constant 8 : index
      %116 = memref.load %arg2[%c8] : memref<18xf32, #tpu.memory_space<smem>>
      %117 = arith.mulf %105, %67 : vector<16x16xf32>
      %118 = vector.broadcast %116 : f32 to vector<16x16xf32>
      %119 = arith.mulf %118, %117 : vector<16x16xf32>
      %120 = arith.addf %115, %119 : vector<16x16xf32>
      %c1_i32_41 = arith.constant 1 : i32
      %121 = tpu.dynamic_rotate %17 by %c1_i32_41 dim 0 : vector<16x16xf32>, i32 -> vector<16x16xf32>
      %c15_i32_42 = arith.constant 15 : i32
      %122 = tpu.dynamic_rotate %17 by %c15_i32_42 dim 0 : vector<16x16xf32>, i32 -> vector<16x16xf32>
      %c1_i32_43 = arith.constant 1 : i32
      %123 = tpu.dynamic_rotate %121 by %c1_i32_43 dim 1 : vector<16x16xf32>, i32 -> vector<16x16xf32>
      %c15_i32_44 = arith.constant 15 : i32
      %124 = tpu.dynamic_rotate %121 by %c15_i32_44 dim 1 : vector<16x16xf32>, i32 -> vector<16x16xf32>
      %c9 = arith.constant 9 : index
      %125 = memref.load %arg2[%c9] : memref<18xf32, #tpu.memory_space<smem>>
      %126 = arith.mulf %123, %64 : vector<16x16xf32>
      %127 = vector.broadcast %125 : f32 to vector<16x16xf32>
      %128 = arith.mulf %127, %126 : vector<16x16xf32>
      %129 = arith.addf %120, %128 : vector<16x16xf32>
      %c10 = arith.constant 10 : index
      %130 = memref.load %arg2[%c10] : memref<18xf32, #tpu.memory_space<smem>>
      %131 = arith.mulf %121, %30 : vector<16x16xf32>
      %132 = vector.broadcast %130 : f32 to vector<16x16xf32>
      %133 = arith.mulf %132, %131 : vector<16x16xf32>
      %134 = arith.addf %129, %133 : vector<16x16xf32>
      %c11 = arith.constant 11 : index
      %135 = memref.load %arg2[%c11] : memref<18xf32, #tpu.memory_space<smem>>
      %136 = arith.mulf %124, %65 : vector<16x16xf32>
      %137 = vector.broadcast %135 : f32 to vector<16x16xf32>
      %138 = arith.mulf %137, %136 : vector<16x16xf32>
      %139 = arith.addf %134, %138 : vector<16x16xf32>
      %c1_i32_45 = arith.constant 1 : i32
      %140 = tpu.dynamic_rotate %17 by %c1_i32_45 dim 1 : vector<16x16xf32>, i32 -> vector<16x16xf32>
      %c15_i32_46 = arith.constant 15 : i32
      %141 = tpu.dynamic_rotate %17 by %c15_i32_46 dim 1 : vector<16x16xf32>, i32 -> vector<16x16xf32>
      %c12 = arith.constant 12 : index
      %142 = memref.load %arg2[%c12] : memref<18xf32, #tpu.memory_space<smem>>
      %143 = arith.mulf %140, %52 : vector<16x16xf32>
      %144 = vector.broadcast %142 : f32 to vector<16x16xf32>
      %145 = arith.mulf %144, %143 : vector<16x16xf32>
      %146 = arith.addf %139, %145 : vector<16x16xf32>
      %c13 = arith.constant 13 : index
      %147 = memref.load %arg2[%c13] : memref<18xf32, #tpu.memory_space<smem>>
      %148 = vector.broadcast %147 : f32 to vector<16x16xf32>
      %149 = arith.mulf %148, %17 : vector<16x16xf32>
      %150 = arith.addf %146, %149 : vector<16x16xf32>
      %c14 = arith.constant 14 : index
      %151 = memref.load %arg2[%c14] : memref<18xf32, #tpu.memory_space<smem>>
      %152 = arith.mulf %141, %63 : vector<16x16xf32>
      %153 = vector.broadcast %151 : f32 to vector<16x16xf32>
      %154 = arith.mulf %153, %152 : vector<16x16xf32>
      %155 = arith.addf %150, %154 : vector<16x16xf32>
      %c1_i32_47 = arith.constant 1 : i32
      %156 = tpu.dynamic_rotate %122 by %c1_i32_47 dim 1 : vector<16x16xf32>, i32 -> vector<16x16xf32>
      %c15_i32_48 = arith.constant 15 : i32
      %157 = tpu.dynamic_rotate %122 by %c15_i32_48 dim 1 : vector<16x16xf32>, i32 -> vector<16x16xf32>
      %c15 = arith.constant 15 : index
      %158 = memref.load %arg2[%c15] : memref<18xf32, #tpu.memory_space<smem>>
      %159 = arith.mulf %156, %66 : vector<16x16xf32>
      %160 = vector.broadcast %158 : f32 to vector<16x16xf32>
      %161 = arith.mulf %160, %159 : vector<16x16xf32>
      %162 = arith.addf %155, %161 : vector<16x16xf32>
      %c16 = arith.constant 16 : index
      %163 = memref.load %arg2[%c16] : memref<18xf32, #tpu.memory_space<smem>>
      %164 = arith.mulf %122, %41 : vector<16x16xf32>
      %165 = vector.broadcast %163 : f32 to vector<16x16xf32>
      %166 = arith.mulf %165, %164 : vector<16x16xf32>
      %167 = arith.addf %162, %166 : vector<16x16xf32>
      %c17 = arith.constant 17 : index
      %168 = memref.load %arg2[%c17] : memref<18xf32, #tpu.memory_space<smem>>
      %169 = arith.mulf %157, %67 : vector<16x16xf32>
      %170 = vector.broadcast %168 : f32 to vector<16x16xf32>
      %171 = arith.mulf %170, %169 : vector<16x16xf32>
      %172 = arith.addf %167, %171 : vector<16x16xf32>
      %173 = arith.negf %172 : vector<16x16xf32>
      %174 = math.exp %173 : vector<16x16xf32>
      %cst_49 = arith.constant 1.000000e+00 : f32
      %175 = vector.broadcast %cst_49 : f32 to vector<16x16xf32>
      %176 = arith.addf %175, %174 : vector<16x16xf32>
      %177 = arith.divf %175, %176 : vector<16x16xf32>
      %c0_50 = arith.constant 0 : index
      %c0_51 = arith.constant 0 : index
      %c0_52 = arith.constant 0 : index
      %c0_53 = arith.constant 0 : index
      %178 = vector.load %arg4[%c0_50, %c0_51, %c0_52, %c0_53] : memref<1x1x16x16xf32, #tpu.memory_space<vmem>>, vector<1x1x16x16xf32>
      %179 = vector.shape_cast %178 : vector<1x1x16x16xf32> to vector<16x16xf32>
      %180 = vector.shape_cast %177 : vector<16x16xf32> to vector<1x1x16x16xf32>
      tpu.vector_store %arg4[%c0_50, %c0_51, %c0_52, %c0_53], %180 {strides = array<i32>} : memref<1x1x16x16xf32, #tpu.memory_space<vmem>>, vector<1x1x16x16xf32>,
    } else {
    }
    return
  }
  func.func @transform_0(%arg0: i32, %arg1: i32) -> i32 {
    %c0_i32 = arith.constant 0 : i32
    %c0_i32_0 = arith.constant 0 : i32
    return %c0_i32 : i32
  }
  func.func @transform_1(%arg0: i32, %arg1: i32) -> (i32, i32, i32, i32) {
    %c0_i32 = arith.constant 0 : i32
    %c0_i32_0 = arith.constant 0 : i32
    %c0_i32_1 = arith.constant 0 : i32
    return %arg0, %arg1, %c0_i32, %c0_i32_0 : i32, i32, i32, i32
  }
  func.func @transform_2(%arg0: i32, %arg1: i32) -> (i32, i32, i32, i32) {
    %c0_i32 = arith.constant 0 : i32
    %c0_i32_0 = arith.constant 0 : i32
    %c0_i32_1 = arith.constant 0 : i32
    %c0_i32_2 = arith.constant 0 : i32
    return %arg0, %c0_i32, %c0_i32_0, %c0_i32_1 : i32, i32, i32, i32
  }
}

</mosaic_0001>

<llo_original>
// kernel: spatial_attention.1
$region0: #{spatial_attention.1}
  #allocation0 [shape = 'u32[]', space=smem, size = 0x4, offset = 0x4, fixed_abs, tag = 'smem constant byte address 0x4 - core index']
  #allocation1 [shape = 'u32[72,128]{1,0:T(1,128)}', space=vmem, size = 0x9000, scoped, tag = 'internal scratch']
  #allocation2 [shape = 'f32[16,16]{1,0:T(8,128)}', space=vmem, size = 0x2000, scoped, tag = 'scratch operand']
  #allocation3 [shape = 'f32[16,16]{1,0:T(8,128)}', space=vmem, size = 0x2000, scoped, tag = 'scratch operand']
  %s0 = inlined_call_operand.vmem [shape: f32[18], index: 0, kind: input, shape index: {}]
  %s1 = inlined_call_operand.hbm [shape: f32[2,4,16,16], index: 1, kind: input, shape index: {}]
  %s2 = inlined_call_operand.hbm [shape: f32[2,1,16,16], index: 2, kind: output, shape index: {}]
  %s3 = sld [smem:[#allocation0]]
  $region57: #{spatial_attention.1} parent=0
    _
  %s5 = ssub.s32 1, %s3
  %s6 = scalar_select 0, %s5, %s3
  $region1: #{spatial_attention.1} parent=0
    #allocation4 [shape = 'u8[512]{0}', space=smem, size = 0x200, scoped, tag = 'input window, operand 0, single buffered']
    #allocation5 [shape = 's32[2]{0}', space=sflag, size = 0x8, scoped, tag = 'scoped memory for spatial_attention.1']
    #allocation6 [shape = 's32[2]{0}', space=sflag, size = 0x8, scoped, tag = 'scoped memory for spatial_attention.1']
    #allocation7 [shape = 's32[2]{0}', space=sflag, size = 0x8, scoped, tag = 'scoped memory for spatial_attention.1']
    #allocation8 [shape = 'u8[65536]{0}', space=vmem, size = 0x10000, scoped, tag = 'input window, operand 1']
    #allocation9 [shape = 'u8[16384]{0}', space=vmem, size = 0x4000, scoped, tag = 'output window, operand 0']
    %7 = vsyncpa [#allocation7], 0
    %8 = vsyncpa [#allocation5], 0
    %s9 = scalar_lea.sflag [#allocation5], 1
    %10 = vsyncpa %s9, 0
    %11 = vsyncpa [#allocation6], 0
    %s12 = scalar_lea.sflag [#allocation6], 1
    %13 = vsyncpa %s12, 0
    loop: start=0, step=1, limit=4
    $region2: #{spatial_attention.1} parent=1 // loop_pre_header
      _
    $region3: #{spatial_attention.1} parent=1 // loop_header
      %s15 = sphi 0, %s19
      %p16 = scmp.ge.s32.totalorder %s15, 4
      %s22 = sphi 0, %s34
      %s23 = sphi 0, %s30
      %s24 = sphi 0, %s22
      %s25 = sphi 0, %s23
      %s26 = sphi 0, %s24
      %s27 = sphi 0, %s25
      %s35 = sphi 0, %s35
      %s37 = sphi 0, %s35
      %s38 = sphi 0, %s37
      %s52 = sphi 0, %s38
      %s60 = sphi 0, %s62
      %s63 = sphi 0, %s60
      %s64 = sphi 0, %s63
      %s80 = sphi 0, %s64
      %s86 = sphi 0, %s88
      %s89 = sphi 0, %s86
      %s90 = sphi 0, %s89
      %s106 = sphi 0, %s90
    $region4: #{spatial_attention.1} parent=1 // loop_header_branch
      %18 = sbr.rel (%p16) target = $region8
    $region5: #{spatial_attention.1} parent=1 // loop_body
      %s20 = ssub.s32 %s15, 1
      %s21 = ssub.s32 %s15, 2
      %s28 = sadd.s32 1, %s23
      %p29 = scmp.ge.s32.totalorder %s28, 1
      %s30 = scalar_select %p29, 0, %s28
      %s31 = sadd.s32 1, %s22
      %s32 = scalar_select %p29, %s31, %s22
      %p33 = scmp.ge.s32.totalorder %s32, 2
      %s34 = scalar_select %p33, 0, %s32
      %s36 = sadd.s32 %s35, 1
      %p39 = scmp.eq.s32.totalorder %s15, 1
      %p40 = scmp.ne.s32.totalorder %s35, %s37
      %p41 = scmp.eq.s32.totalorder %s15, 0
      %p42 = por %p40, %p41
      %p43 = scmp.ne.s32.totalorder %s35, %s37
      %p44 = scmp.eq.s32.totalorder %s20, 1
      %p45 = por %p43, %p44
      %p46 = scmp.ne.s32.totalorder %s37, %s38
      %p47 = scmp.eq.s32.totalorder %s20, 0
      %p48 = por %p46, %p47
      %p49 = scmp.ne.s32.totalorder %s37, %s38
      %p50 = scmp.eq.s32.totalorder %s21, 1
      %p51 = por %p49, %p50
      %p53 = scmp.ne.s32.totalorder %s38, %s52
      %p54 = scmp.eq.s32.totalorder %s21, 0
      %p55 = por %p53, %p54
      %s56 = ssub.s32 %s22, %s34
      %s57 = ssub.s32 %s23, %s30
      %s58 = sor.u32 %s56, %s57
      %p59 = scmp.eq.s32.totalorder %s58, 0
      %s61 = sadd.s32 %s60, 1
      %s62 = scalar_select %p59, %s60, %s61
      %p65 = pneg %p59
      %p66 = scmp.eq.s32.totalorder %s15, 1
      %p67 = por %p65, %p66
      %p68 = scmp.ne.s32.totalorder %s60, %s63
      %p69 = scmp.eq.s32.totalorder %s15, 0
      %p70 = por %p68, %p69
      %p71 = scmp.ne.s32.totalorder %s60, %s63
      %p72 = scmp.eq.s32.totalorder %s20, 1
      %p73 = por %p71, %p72
      %p74 = scmp.ne.s32.totalorder %s63, %s64
      %p75 = scmp.eq.s32.totalorder %s20, 0
      %p76 = por %p74, %p75
      %p77 = scmp.ne.s32.totalorder %s63, %s64
      %p78 = scmp.eq.s32.totalorder %s21, 1
      %p79 = por %p77, %p78
      %p81 = scmp.ne.s32.totalorder %s64, %s80
      %p82 = scmp.eq.s32.totalorder %s21, 0
      %p83 = por %p81, %p82
      %s84 = ssub.s32 %s22, %s34
      %p85 = scmp.eq.s32.totalorder %s84, 0
      %s87 = sadd.s32 %s86, 1
      %s88 = scalar_select %p85, %s86, %s87
      %p91 = pneg %p85
      %p92 = scmp.eq.s32.totalorder %s15, 1
      %p93 = por %p91, %p92
      %p94 = scmp.ne.s32.totalorder %s86, %s89
      %p95 = scmp.eq.s32.totalorder %s15, 0
      %p96 = por %p94, %p95
      %p97 = scmp.ne.s32.totalorder %s86, %s89
      %p98 = scmp.eq.s32.totalorder %s20, 1
      %p99 = por %p97, %p98
      %p100 = scmp.ne.s32.totalorder %s89, %s90
      %p101 = scmp.eq.s32.totalorder %s20, 0
      %p102 = por %p100, %p101
      %p103 = scmp.ne.s32.totalorder %s89, %s90
      %p104 = scmp.eq.s32.totalorder %s21, 1
      %p105 = por %p103, %p104
      %p107 = scmp.ne.s32.totalorder %s90, %s106
      %p108 = scmp.eq.s32.totalorder %s21, 0
      %p109 = por %p107, %p108
      %p110 = scmp.le.s32.totalorder 1, %s15
      %p111 = scmp.lt.s32.totalorder %s15, 3
      %p112 = pnand %p110, %p111
      %p113 = pneg %p112
      // Predicated region
      $region9: #{spatial_attention.1} parent=5 // pred_check
        _
      $region10: #{spatial_attention.1} parent=5 // pred_check_branch
        %115 = sbr.rel (%p112) target = $region12
      $region11: #{spatial_attention.1} parent=5 // pred_region
        %s116 = ssub.s32 %s15, 1
        // Predicated region
        $region13: #{spatial_attention.1} parent=11 // pred_check
          %p117 = pneg %p48
        $region14: #{spatial_attention.1} parent=11 // pred_check_branch
          %119 = sbr.rel (%p117) target = $region16
        $region15: #{spatial_attention.1} parent=11 // pred_region
          %121 = vsyncadd [#allocation7], 0
          %s123 = sshll.u32 %s0, 4
          %s124 = int_to_ptr.vmem [resolvable:$true] %s123
          %126 = dma.vmem_to_smem %s124, 16, [#allocation4], [#allocation7]
        $region16: #{spatial_attention.1} parent=11 // pred_fallthru
          _
      $region12: #{spatial_attention.1} parent=5 // pred_fallthru
        _
      %p127 = scmp.lt.s32.totalorder %s15, 2
      // Predicated region
      $region17: #{spatial_attention.1} parent=5 // pred_check
        %p128 = pneg %p127
      $region18: #{spatial_attention.1} parent=5 // pred_check_branch
        %130 = sbr.rel (%p128) target = $region20
      $region19: #{spatial_attention.1} parent=5 // pred_region
        // Predicated region
        $region21: #{spatial_attention.1} parent=19 // pred_check
          %p131 = pneg %p70
        $region22: #{spatial_attention.1} parent=19 // pred_check_branch
          %133 = sbr.rel (%p131) target = $region24
        $region23: #{spatial_attention.1} parent=19 // pred_region
          %s134 = sand.u32 %s60, 1
          %s135 = scalar_lea.sflag [#allocation5], %s134
          %s136 = sand.u32 %s60, 1
          %s137 = smul.addr %s136, 64
          %s138 = scalar_lea.vmem [#allocation8], %s137
          %s139 = smul.u32 4, %s23
          %141 = vsyncadd %s135, 0
          %s142 = smul.addr %s139, 2
          %s143 = smul.addr %s22, 8
          %s144 = sadd.s32 %s142, %s143
          %s145 = smul.addr %s144, 8
          %s146 = scalar_lea.hbm %s1, %s145
          %s147 = sshll.u32 %s146, 4
          %s148 = int_to_ptr.hbm [resolvable:$true] %s147
          %s149 = sshll.u32 %s138, 4
          %s150 = int_to_ptr.vmem [resolvable:$true] %s149
          %155 = dma.hbm_to_vmem [thread:$0]  %s148, 1024, %s150, %s135, 128, 128, 8
        $region24: #{spatial_attention.1} parent=19 // pred_fallthru
          _
      $region20: #{spatial_attention.1} parent=5 // pred_fallthru
        _
      %p156 = scmp.le.s32.totalorder 1, %s15
      %p157 = scmp.lt.s32.totalorder %s15, 3
      %p158 = pnand %p156, %p157
      %p159 = pneg %p158
      // Predicated region
      $region25: #{spatial_attention.1} parent=5 // pred_check
        _
      $region26: #{spatial_attention.1} parent=5 // pred_check_branch
        %161 = sbr.rel (%p158) target = $region28
      $region27: #{spatial_attention.1} parent=5 // pred_region
        %s162 = ssub.s32 %s15, 1
        // Predicated region
        $region29: #{spatial_attention.1} parent=27 // pred_check
          %p163 = pneg %p48
        $region30: #{spatial_attention.1} parent=27 // pred_check_branch
          %165 = sbr.rel (%p163) target = $region32
        $region31: #{spatial_attention.1} parent=27 // pred_region
          %167 = dma.done [#allocation7], 16
        $region32: #{spatial_attention.1} parent=27 // pred_fallthru
          _
        %s168 = sand.u32 %s63, 1
        %s169 = scalar_lea.sflag [#allocation5], %s168
        %s170 = sand.u32 %s63, 1
        %s171 = smul.addr %s170, 64
        %s172 = scalar_lea.vmem [#allocation8], %s171
        // Predicated region
        $region33: #{spatial_attention.1} parent=27 // pred_check
          %p173 = pneg %p76
        $region34: #{spatial_attention.1} parent=27 // pred_check_branch
          %175 = sbr.rel (%p173) target = $region36
        $region35: #{spatial_attention.1} parent=27 // pred_region
          %177 = dma.done %s169, 1024
        $region36: #{spatial_attention.1} parent=27 // pred_fallthru
          _
        %178 = sfence
        %p179 = pneg %p48
        %p180 = pneg %p45
        %s181 = sand.u32 %s63, 1
        %s182 = scalar_lea.sflag [#allocation5], %s181
        %s183 = sand.u32 %s63, 1
        %s184 = smul.addr %s183, 64
        %s185 = scalar_lea.vmem [#allocation8], %s184
        %p186 = pneg %p76
        %p187 = pneg %p73
        %p188 = pneg %p102
        %p189 = pneg %p99
        %s190 = sand.u32 %s89, 1
        %s191 = scalar_lea.sflag [#allocation6], %s190
        %s192 = sand.u32 %s89, 1
        %s193 = smul.addr %s192, 16
        %s194 = scalar_lea.vmem [#allocation9], %s193
        %s195 = smul.u32 4, %s25
        %v196 = vld [vmem:[%s172] sm:$0xff]
        %v197 = vld [vmem:[%s172 + $0x8] sm:$0xff]
        %v198 = vld [vmem:[%s172 + $0x10] sm:$0xff]
        %v199 = vld [vmem:[%s172 + $0x18] sm:$0xff]
        %v200 = vld [vmem:[%s172 + $0x20] sm:$0xff]
        %v201 = vld [vmem:[%s172 + $0x28] sm:$0xff]
        %v202 = vld [vmem:[%s172 + $0x30] sm:$0xff]
        %v203 = vld [vmem:[%s172 + $0x38] sm:$0xff]
        %p204 = scmp.eq.s32.totalorder %s25, 0
        // Predicated region
        $region37: #{spatial_attention.1} parent=27 // pred_check
          %p205 = pneg %p204
        $region38: #{spatial_attention.1} parent=27 // pred_check_branch
          %207 = sbr.rel (%p205) target = $region40
        $region39: #{spatial_attention.1} parent=27 // pred_region
          %vm208 = vcmask 130048
          %209 = vst.msk [vmem:[#allocation2] sm:$0xff] %vm208, -inf
          %210 = vst.msk [vmem:[#allocation2 + $0x8] sm:$0xff] %vm208, -inf
          %211 = vst.msk [vmem:[#allocation3] sm:$0xff] %vm208, 0.0
          %212 = vst.msk [vmem:[#allocation3 + $0x8] sm:$0xff] %vm208, 0.0
        $region40: #{spatial_attention.1} parent=27 // pred_fallthru
          _
        %v213 = vld [vmem:[#allocation2] sm:$0xff]
        %v214 = vld [vmem:[#allocation2 + $0x8] sm:$0xff]
        %vm215 = vcmask 130048
        %v216 = vsel %vm215, %v196, -inf
        %v217 = vsel %vm215, %v198, -inf
        %v218 = vsel %vm215, %v200, -inf
        %v219 = vmax.f32 %v216, %v218
        %v220 = vsel %vm215, %v202, -inf
        %v221 = vmax.f32 %v217, %v220
        %v222 = vmax.f32 %v219, %v221
        %v223 = vsel %vm215, %v197, -inf
        %v224 = vsel %vm215, %v199, -inf
        %v225 = vsel %vm215, %v201, -inf
        %v226 = vmax.f32 %v223, %v225
        %v227 = vsel %vm215, %v203, -inf
        %v228 = vmax.f32 %v224, %v227
        %v229 = vmax.f32 %v226, %v228
        %v230 = vmax.f32 %v213, %v222
        %v231 = vmax.f32 %v214, %v229
        %232 = vst.msk [vmem:[#allocation2] sm:$0xff] %vm215, %v230
        %233 = vst.msk [vmem:[#allocation2 + $0x8] sm:$0xff] %vm215, %v231
        %v234 = vld [vmem:[#allocation3] sm:$0xff]
        %v235 = vld [vmem:[#allocation3 + $0x8] sm:$0xff]
        %v236 = vsel %vm215, %v196, 0.0
        %v237 = vsel %vm215, %v198, 0.0
        %v238 = vadd.f32 %v236, %v237
        %v239 = vsel %vm215, %v200, 0.0
        %v240 = vadd.f32 %v238, %v239
        %v241 = vsel %vm215, %v202, 0.0
        %v242 = vadd.f32 %v240, %v241
        %v243 = vsel %vm215, %v197, 0.0
        %v244 = vsel %vm215, %v199, 0.0
        %v245 = vadd.f32 %v243, %v244
        %v246 = vsel %vm215, %v201, 0.0
        %v247 = vadd.f32 %v245, %v246
        %v248 = vsel %vm215, %v203, 0.0
        %v249 = vadd.f32 %v247, %v248
        %v250 = vadd.f32 %v234, %v242
        %v251 = vadd.f32 %v235, %v249
        %252 = vst.msk [vmem:[#allocation3] sm:$0xff] %vm215, %v250
        %253 = vst.msk [vmem:[#allocation3 + $0x8] sm:$0xff] %vm215, %v251
        // Predicated region
        $region41: #{spatial_attention.1} parent=27 // pred_check
          %p254 = pneg %p204
        $region42: #{spatial_attention.1} parent=27 // pred_check_branch
          %256 = sbr.rel (%p254) target = $region44
        $region43: #{spatial_attention.1} parent=27 // pred_region
          %v257 = vld [vmem:[#allocation2] sm:$0xff]
          %v258 = vld [vmem:[#allocation2 + $0x8] sm:$0xff]
          %v259 = vld [vmem:[#allocation3] sm:$0xff]
          %v260 = vld [vmem:[#allocation3 + $0x8] sm:$0xff]
          %v261 = vlaneseq
          %v262 = vshrl.u32 %v261, 7
          %v263 = vadd.s32 %v262, 8
          %v264 = vlaneseq
          %v265 = vand.u32 %v264, 127
          %v266 = vadd.s32 %v262, 4294967295
          %v267 = vadd.s32 %v263, 4294967295
          %vm268 = vcmp.ge.s32.totalorder %v266, 0
          %vm269 = vcmp.ge.s32.totalorder %v267, 0
          %vm270 = vcmp.lt.s32.totalorder %v266, 16
          %vm271 = vcmp.lt.s32.totalorder %v267, 16
          %vm272 = vmand %vm268, %vm270
          %vm273 = vmand %vm269, %vm271
          %v274 = vsel %vm272, 1, 0
          %v275 = vsel %vm273, 1, 0
          %v276 = vcvt.s32.f32 %v274
          %v277 = vcvt.s32.f32 %v275
          %v278 = vadd.s32 %v262, 1
          %v279 = vadd.s32 %v263, 1
          %vm280 = vcmp.ge.s32.totalorder %v278, 0
          %vm281 = vcmp.ge.s32.totalorder %v279, 0
          %vm282 = vcmp.lt.s32.totalorder %v278, 16
          %vm283 = vcmp.lt.s32.totalorder %v279, 16
          %vm284 = vmand %vm280, %vm282
          %vm285 = vmand %vm281, %vm283
          %v286 = vsel %vm284, 1, 0
          %v287 = vsel %vm285, 1, 0
          %v288 = vcvt.s32.f32 %v286
          %v289 = vcvt.s32.f32 %v287
          %v290 = vadd.s32 %v265, 4294967295
          %vm291 = vcmp.ge.s32.totalorder %v290, 0
          %vm292 = vcmp.lt.s32.totalorder %v290, 16
          %vm293 = vmand %vm291, %vm292
          %v294 = vsel %vm293, 1, 0
          %v295 = vcvt.s32.f32 %v294
          %v296 = vadd.s32 %v265, 1
          %vm297 = vcmp.ge.s32.totalorder %v296, 0
          %vm298 = vcmp.lt.s32.totalorder %v296, 16
          %vm299 = vmand %vm297, %vm298
          %v300 = vsel %vm299, 1, 0
          %v301 = vcvt.s32.f32 %v300
          %v302 = vmul.f32 %v276, %v295
          %v303 = vmul.f32 %v277, %v295
          %v304 = vmul.f32 %v276, %v301
          %v305 = vmul.f32 %v277, %v301
          %v306 = vmul.f32 %v288, %v295
          %v307 = vmul.f32 %v289, %v295
          %v308 = vmul.f32 %v288, %v301
          %v309 = vmul.f32 %v289, %v301
          %v310 = vrot.slane %v257, 7
          %v311 = vrot.slane %v258, 7
          %vm312 = vcmp.lt.s32.totalorder %v262, 1
          %v313 = vsel %vm312, %v310, %v311
          %v314 = vsel %vm312, %v311, %v310
          %v315 = vrot.slane %v257, 1
          %v316 = vrot.slane %v258, 1
          %vm317 = vcmp.lt.s32.totalorder %v262, 7
          %v318 = vsel %vm317, %v315, %v316
          %v319 = vsel %vm317, %v316, %v315
          %vm320 = vcmask 1047680
          %321 = vrot.lane.b32.xlu0 %v314, 16
          %v322 = vpop.permute.xlu0 %321
          %v323 = vsel %vm320, %v322, %v314
          %324 = vrot.lane.b32.xlu0 %v313, 16
          %v325 = vpop.permute.xlu0 %324
          %v326 = vsel %vm320, %v325, %v313
          %327 = vrot.lane.b32.xlu0 %v323, 16
          %v328 = vpop.permute.xlu0 %327
          %329 = vrot.lane.b32.xlu0 %v326, 16
          %v330 = vpop.permute.xlu0 %329
          %v331 = vsel %vm320, %v328, %v314
          %v332 = vsel %vm320, %v330, %v313
          %s333 = sld [smem:[#allocation4]]
          %336 = vrot.lane.b32.xlu0 %v302, 15
          %v337 = vpop.permute.xlu0 %336
          %338 = vrot.lane.b32.xlu0 %v303, 15
          %v339 = vpop.permute.xlu0 %338
          %v342 = vmul.f32 %v331, %v337
          %v343 = vmul.f32 %v332, %v339
          %v344 = vstv %s333
          %v345 = vmul.f32 %v344, %v342
          %v346 = vmul.f32 %v344, %v343
          %v347 = vadd.f32 %v345, 0.0
          %v348 = vadd.f32 %v346, 0.0
          %s349 = sld [smem:[#allocation4 + $0x1]]
          %v350 = vmul.f32 %v314, %v276
          %v351 = vmul.f32 %v313, %v277
          %v352 = vstv %s349
          %v353 = vmul.f32 %v352, %v350
          %v354 = vmul.f32 %v352, %v351
          %357 = vrot.lane.b32.xlu0 %v353, 15
          %v358 = vpop.permute.xlu0 %357
          %359 = vrot.lane.b32.xlu0 %v354, 15
          %v360 = vpop.permute.xlu0 %359
          %v363 = vadd.f32 %v347, %v358
          %v364 = vadd.f32 %v348, %v360
          %s365 = sld [smem:[#allocation4 + $0x2]]
          %368 = vrot.lane.b32.xlu0 %v304, 1
          %v369 = vpop.permute.xlu0 %368
          %370 = vrot.lane.b32.xlu0 %v305, 1
          %v371 = vpop.permute.xlu0 %370
          %v374 = vmul.f32 %v331, %v369
          %v375 = vmul.f32 %v332, %v371
          %v376 = vstv %s365
          %v377 = vmul.f32 %v376, %v374
          %v378 = vmul.f32 %v376, %v375
          %381 = vrot.lane.b32.xlu0 %v377, 14
          %v382 = vpop.permute.xlu0 %381
          %383 = vrot.lane.b32.xlu0 %v378, 14
          %v384 = vpop.permute.xlu0 %383
          %v387 = vadd.f32 %v363, %v382
          %v388 = vadd.f32 %v364, %v384
          %389 = vrot.lane.b32.xlu0 %v257, 16
          %v390 = vpop.permute.xlu0 %389
          %v391 = vsel %vm320, %v390, %v257
          %392 = vrot.lane.b32.xlu0 %v258, 16
          %v393 = vpop.permute.xlu0 %392
          %v394 = vsel %vm320, %v393, %v258
          %395 = vrot.lane.b32.xlu0 %v391, 16
          %v396 = vpop.permute.xlu0 %395
          %397 = vrot.lane.b32.xlu0 %v394, 16
          %v398 = vpop.permute.xlu0 %397
          %v399 = vsel %vm320, %v396, %v257
          %v400 = vsel %vm320, %v398, %v258
          %s401 = sld [smem:[#allocation4 + $0x3]]
          %403 = vrot.lane.b32.xlu0 %v295, 15
          %v404 = vpop.permute.xlu0 %403
          %v406 = vmul.f32 %v399, %v404
          %v407 = vmul.f32 %v400, %v404
          %v408 = vstv %s401
          %v409 = vmul.f32 %v408, %v406
          %v410 = vmul.f32 %v408, %v407
          %v411 = vadd.f32 %v387, %v409
          %v412 = vadd.f32 %v388, %v410
          %s413 = sld [smem:[#allocation4 + $0x4]]
          %v414 = vstv %s413
          %v415 = vmul.f32 %v414, %v257
          %v416 = vmul.f32 %v414, %v258
          %419 = vrot.lane.b32.xlu0 %v415, 15
          %v420 = vpop.permute.xlu0 %419
          %421 = vrot.lane.b32.xlu0 %v416, 15
          %v422 = vpop.permute.xlu0 %421
          %v425 = vadd.f32 %v411, %v420
          %v426 = vadd.f32 %v412, %v422
          %s427 = sld [smem:[#allocation4 + $0x5]]
          %429 = vrot.lane.b32.xlu0 %v301, 1
          %v430 = vpop.permute.xlu0 %429
          %v432 = vmul.f32 %v399, %v430
          %v433 = vmul.f32 %v400, %v430
          %v434 = vstv %s427
          %v435 = vmul.f32 %v434, %v432
          %v436 = vmul.f32 %v434, %v433
          %439 = vrot.lane.b32.xlu0 %v435, 14
          %v440 = vpop.permute.xlu0 %439
          %441 = vrot.lane.b32.xlu0 %v436, 14
          %v442 = vpop.permute.xlu0 %441
          %v445 = vadd.f32 %v425, %v440
          %v446 = vadd.f32 %v426, %v442
          %447 = vrot.lane.b32.xlu0 %v318, 16
          %v448 = vpop.permute.xlu0 %447
          %v449 = vsel %vm320, %v448, %v318
          %450 = vrot.lane.b32.xlu0 %v319, 16
          %v451 = vpop.permute.xlu0 %450
          %v452 = vsel %vm320, %v451, %v319
          %453 = vrot.lane.b32.xlu0 %v449, 16
          %v454 = vpop.permute.xlu0 %453
          %455 = vrot.lane.b32.xlu0 %v452, 16
          %v456 = vpop.permute.xlu0 %455
          %v457 = vsel %vm320, %v454, %v318
          %v458 = vsel %vm320, %v456, %v319
          %s459 = sld [smem:[#allocation4 + $0x6]]
          %462 = vrot.lane.b32.xlu0 %v306, 15
          %v463 = vpop.permute.xlu0 %462
          %464 = vrot.lane.b32.xlu0 %v307, 15
          %v465 = vpop.permute.xlu0 %464
          %v468 = vmul.f32 %v457, %v463
          %v469 = vmul.f32 %v458, %v465
          %v470 = vstv %s459
          %v471 = vmul.f32 %v470, %v468
          %v472 = vmul.f32 %v470, %v469
          %v473 = vadd.f32 %v445, %v471
          %v474 = vadd.f32 %v446, %v472
          %s475 = sld [smem:[#allocation4 + $0x7]]
          %v476 = vmul.f32 %v318, %v288
          %v477 = vmul.f32 %v319, %v289
          %v478 = vstv %s475
          %v479 = vmul.f32 %v478, %v476
          %v480 = vmul.f32 %v478, %v477
          %483 = vrot.lane.b32.xlu0 %v479, 15
          %v484 = vpop.permute.xlu0 %483
          %485 = vrot.lane.b32.xlu0 %v480, 15
          %v486 = vpop.permute.xlu0 %485
          %v489 = vadd.f32 %v473, %v484
          %v490 = vadd.f32 %v474, %v486
          %s491 = sld [smem:[#allocation4 + $0x8]]
          %494 = vrot.lane.b32.xlu0 %v308, 1
          %v495 = vpop.permute.xlu0 %494
          %496 = vrot.lane.b32.xlu0 %v309, 1
          %v497 = vpop.permute.xlu0 %496
          %v500 = vmul.f32 %v457, %v495
          %v501 = vmul.f32 %v458, %v497
          %v502 = vstv %s491
          %v503 = vmul.f32 %v502, %v500
          %v504 = vmul.f32 %v502, %v501
          %507 = vrot.lane.b32.xlu0 %v503, 14
          %v508 = vpop.permute.xlu0 %507
          %509 = vrot.lane.b32.xlu0 %v504, 14
          %v510 = vpop.permute.xlu0 %509
          %v513 = vadd.f32 %v489, %v508
          %v514 = vadd.f32 %v490, %v510
          %v515 = vrot.slane %v259, 7
          %v516 = vrot.slane %v260, 7
          %v517 = vsel %vm312, %v515, %v516
          %v518 = vsel %vm312, %v516, %v515
          %v519 = vrot.slane %v259, 1
          %v520 = vrot.slane %v260, 1
          %v521 = vsel %vm317, %v519, %v520
          %v522 = vsel %vm317, %v520, %v519
          %523 = vrot.lane.b32.xlu0 %v518, 16
          %v524 = vpop.permute.xlu0 %523
          %v525 = vsel %vm320, %v524, %v518
          %526 = vrot.lane.b32.xlu0 %v517, 16
          %v527 = vpop.permute.xlu0 %526
          %v528 = vsel %vm320, %v527, %v517
          %529 = vrot.lane.b32.xlu0 %v525, 16
          %v530 = vpop.permute.xlu0 %529
          %531 = vrot.lane.b32.xlu0 %v528, 16
          %v532 = vpop.permute.xlu0 %531
          %v533 = vsel %vm320, %v530, %v518
          %v534 = vsel %vm320, %v532, %v517
          %s535 = sld [smem:[#allocation4 + $0x9]]
          %v536 = vmul.f32 %v533, %v337
          %v537 = vmul.f32 %v534, %v339
          %v538 = vstv %s535
          %v539 = vmul.f32 %v538, %v536
          %v540 = vmul.f32 %v538, %v537
          %v541 = vadd.f32 %v513, %v539
          %v542 = vadd.f32 %v514, %v540
          %s543 = sld [smem:[#allocation4 + $0xa]]
          %v544 = vmul.f32 %v518, %v276
          %v545 = vmul.f32 %v517, %v277
          %v546 = vstv %s543
          %v547 = vmul.f32 %v546, %v544
          %v548 = vmul.f32 %v546, %v545
          %551 = vrot.lane.b32.xlu0 %v547, 15
          %v552 = vpop.permute.xlu0 %551
          %553 = vrot.lane.b32.xlu0 %v548, 15
          %v554 = vpop.permute.xlu0 %553
          %v557 = vadd.f32 %v541, %v552
          %v558 = vadd.f32 %v542, %v554
          %s559 = sld [smem:[#allocation4 + $0xb]]
          %v560 = vmul.f32 %v533, %v369
          %v561 = vmul.f32 %v534, %v371
          %v562 = vstv %s559
          %v563 = vmul.f32 %v562, %v560
          %v564 = vmul.f32 %v562, %v561
          %567 = vrot.lane.b32.xlu0 %v563, 14
          %v568 = vpop.permute.xlu0 %567
          %569 = vrot.lane.b32.xlu0 %v564, 14
          %v570 = vpop.permute.xlu0 %569
          %v573 = vadd.f32 %v557, %v568
          %v574 = vadd.f32 %v558, %v570
          %575 = vrot.lane.b32.xlu0 %v259, 16
          %v576 = vpop.permute.xlu0 %575
          %v577 = vsel %vm320, %v576, %v259
          %578 = vrot.lane.b32.xlu0 %v260, 16
          %v579 = vpop.permute.xlu0 %578
          %v580 = vsel %vm320, %v579, %v260
          %581 = vrot.lane.b32.xlu0 %v577, 16
          %v582 = vpop.permute.xlu0 %581
          %583 = vrot.lane.b32.xlu0 %v580, 16
          %v584 = vpop.permute.xlu0 %583
          %v585 = vsel %vm320, %v582, %v259
          %v586 = vsel %vm320, %v584, %v260
          %s587 = sld [smem:[#allocation4 + $0xc]]
          %v588 = vmul.f32 %v585, %v404
          %v589 = vmul.f32 %v586, %v404
          %v590 = vstv %s587
          %v591 = vmul.f32 %v590, %v588
          %v592 = vmul.f32 %v590, %v589
          %v593 = vadd.f32 %v573, %v591
          %v594 = vadd.f32 %v574, %v592
          %s595 = sld [smem:[#allocation4 + $0xd]]
          %v596 = vstv %s595
          %v597 = vmul.f32 %v596, %v259
          %v598 = vmul.f32 %v596, %v260
          %601 = vrot.lane.b32.xlu0 %v597, 15
          %v602 = vpop.permute.xlu0 %601
          %603 = vrot.lane.b32.xlu0 %v598, 15
          %v604 = vpop.permute.xlu0 %603
          %v607 = vadd.f32 %v593, %v602
          %v608 = vadd.f32 %v594, %v604
          %s609 = sld [smem:[#allocation4 + $0xe]]
          %v610 = vmul.f32 %v585, %v430
          %v611 = vmul.f32 %v586, %v430
          %v612 = vstv %s609
          %v613 = vmul.f32 %v612, %v610
          %v614 = vmul.f32 %v612, %v611
          %617 = vrot.lane.b32.xlu0 %v613, 14
          %v618 = vpop.permute.xlu0 %617
          %619 = vrot.lane.b32.xlu0 %v614, 14
          %v620 = vpop.permute.xlu0 %619
          %v623 = vadd.f32 %v607, %v618
          %v624 = vadd.f32 %v608, %v620
          %625 = vrot.lane.b32.xlu0 %v521, 16
          %v626 = vpop.permute.xlu0 %625
          %v627 = vsel %vm320, %v626, %v521
          %628 = vrot.lane.b32.xlu0 %v522, 16
          %v629 = vpop.permute.xlu0 %628
          %v630 = vsel %vm320, %v629, %v522
          %631 = vrot.lane.b32.xlu0 %v627, 16
          %v632 = vpop.permute.xlu0 %631
          %633 = vrot.lane.b32.xlu0 %v630, 16
          %v634 = vpop.permute.xlu0 %633
          %v635 = vsel %vm320, %v632, %v521
          %v636 = vsel %vm320, %v634, %v522
          %s637 = sld [smem:[#allocation4 + $0xf]]
          %v638 = vmul.f32 %v635, %v463
          %v639 = vmul.f32 %v636, %v465
          %v640 = vstv %s637
          %v641 = vmul.f32 %v640, %v638
          %v642 = vmul.f32 %v640, %v639
          %v643 = vadd.f32 %v623, %v641
          %v644 = vadd.f32 %v624, %v642
          %s645 = sld [smem:[#allocation4 + $0x10]]
          %v646 = vmul.f32 %v521, %v288
          %v647 = vmul.f32 %v522, %v289
          %v648 = vstv %s645
          %v649 = vmul.f32 %v648, %v646
          %v650 = vmul.f32 %v648, %v647
          %653 = vrot.lane.b32.xlu0 %v649, 15
          %v654 = vpop.permute.xlu0 %653
          %655 = vrot.lane.b32.xlu0 %v650, 15
          %v656 = vpop.permute.xlu0 %655
          %v659 = vadd.f32 %v643, %v654
          %v660 = vadd.f32 %v644, %v656
          %s661 = sld [smem:[#allocation4 + $0x11]]
          %v662 = vmul.f32 %v635, %v495
          %v663 = vmul.f32 %v636, %v497
          %v664 = vstv %s661
          %v665 = vmul.f32 %v664, %v662
          %v666 = vmul.f32 %v664, %v663
          %669 = vrot.lane.b32.xlu0 %v665, 14
          %v670 = vpop.permute.xlu0 %669
          %671 = vrot.lane.b32.xlu0 %v666, 14
          %v672 = vpop.permute.xlu0 %671
          %v675 = vadd.f32 %v659, %v670
          %v676 = vadd.f32 %v660, %v672
          %v677 = vxor.u32 %v675, 2147483648
          %v678 = vxor.u32 %v676, 2147483648
          %v679 = vmul.f32 %v677, 1.442695
          %v680 = vpow.pop %v679
          %v681 = vmul.f32 %v678, 1.442695
          %v682 = vpow.pop %v681
          %v683 = vadd.f32 %v680, 1.0
          %v684 = vadd.f32 %v682, 1.0
          %v685 = vrcp.pop %v683
          %v686 = vmul.f32 %v683, %v685
          %v687 = vsub.f32 1.0, %v686
          %v688 = vmul.f32 %v685, %v687
          %v689 = vadd.f32 %v685, %v688
          %vm690 = vweird.f32 %v683
          %vm691 = vweird.f32 %v685
          %vm692 = vmor %vm690, %vm691
          %v693 = vsel %vm692, %v685, %v689
          %v694 = vand.u32 2147483647, %v683
          %vm695 = vcmp.eq.f32.partialorder %v694, 8.507059e+37
          %v696 = vand.u32 %v683, 2147483648
          %v697 = vor.u32 1.1754944e-38, %v696
          %v698 = vsel %vm695, %v697, %v693
          %v699 = vmul.f32 1.0, %v698
          %v700 = vrcp.pop %v684
          %v701 = vmul.f32 %v684, %v700
          %v702 = vsub.f32 1.0, %v701
          %v703 = vmul.f32 %v700, %v702
          %v704 = vadd.f32 %v700, %v703
          %vm705 = vweird.f32 %v684
          %vm706 = vweird.f32 %v700
          %vm707 = vmor %vm705, %vm706
          %v708 = vsel %vm707, %v700, %v704
          %v709 = vand.u32 2147483647, %v684
          %vm710 = vcmp.eq.f32.partialorder %v709, 8.507059e+37
          %v711 = vand.u32 %v684, 2147483648
          %v712 = vor.u32 1.1754944e-38, %v711
          %v713 = vsel %vm710, %v712, %v708
          %v714 = vmul.f32 1.0, %v713
          %717 = vrot.lane.b32.xlu0 %v699, 113
          %v718 = vpop.permute.xlu0 %717
          %719 = vrot.lane.b32.xlu0 %v714, 113
          %v720 = vpop.permute.xlu0 %719
          %723 = vst.msk [vmem:[%s194] sm:$0xff] %vm215, %v718
          %724 = vst.msk [vmem:[%s194 + $0x8] sm:$0xff] %vm215, %v720
        $region44: #{spatial_attention.1} parent=27 // pred_fallthru
          _
        %s725 = sand.u32 %s89, 1
        %s726 = scalar_lea.sflag [#allocation6], %s725
        %s727 = sand.u32 %s89, 1
        %s728 = smul.addr %s727, 16
        %s729 = scalar_lea.vmem [#allocation9], %s728
        // Predicated region
        $region45: #{spatial_attention.1} parent=27 // pred_check
          %p730 = pneg %p99
        $region46: #{spatial_attention.1} parent=27 // pred_check_branch
          %732 = sbr.rel (%p730) target = $region48
        $region47: #{spatial_attention.1} parent=27 // pred_region
          %734 = vsyncadd %s726, 0
          %s735 = smul.addr %s24, 2
          %s736 = smul.addr %s735, 8
          %s737 = scalar_lea.hbm %s2, %s736
          %s738 = sshll.u32 %s729, 4
          %s739 = int_to_ptr.vmem [resolvable:$true] %s738
          %s740 = sshll.u32 %s737, 4
          %s741 = int_to_ptr.hbm [resolvable:$true] %s740
          %746 = dma.vmem_to_hbm [thread:$0]  %s739, 256, %s741, %s726, 128, 128, 8
        $region48: #{spatial_attention.1} parent=27 // pred_fallthru
          _
      $region28: #{spatial_attention.1} parent=5 // pred_fallthru
        _
      %p747 = scmp.le.s32.totalorder 2, %s15
      // Predicated region
      $region49: #{spatial_attention.1} parent=5 // pred_check
        %p748 = pneg %p747
      $region50: #{spatial_attention.1} parent=5 // pred_check_branch
        %750 = sbr.rel (%p748) target = $region52
      $region51: #{spatial_attention.1} parent=5 // pred_region
        %s751 = ssub.s32 %s15, 2
        // Predicated region
        $region53: #{spatial_attention.1} parent=51 // pred_check
          %p752 = pneg %p105
        $region54: #{spatial_attention.1} parent=51 // pred_check_branch
          %754 = sbr.rel (%p752) target = $region56
        $region55: #{spatial_attention.1} parent=51 // pred_region
          %s755 = sand.u32 %s90, 1
          %s756 = scalar_lea.sflag [#allocation6], %s755
          %s757 = sand.u32 %s90, 1
          %s758 = smul.addr %s757, 16
          %s759 = scalar_lea.vmem [#allocation9], %s758
          %761 = dma.done %s756, 256
        $region56: #{spatial_attention.1} parent=51 // pred_fallthru
          _
      $region52: #{spatial_attention.1} parent=5 // pred_fallthru
        _
    $region6: #{spatial_attention.1} parent=1 // loop_footer
      %s19 = sadd.s32 1, %s15
    $region7: #{spatial_attention.1} parent=1 // loop_footer_branch
      %14 = sbr.rel target = $region3
    $region8: #{spatial_attention.1} parent=1 // loop_exit
      _
    %762 = vsyncpa [#allocation5], 1
    %s763 = scalar_lea.sflag [#allocation5], 1
    %764 = vsyncpa %s763, 1
    %765 = vsyncpa [#allocation6], 1
    %s766 = scalar_lea.sflag [#allocation6], 1
    %767 = vsyncpa %s766, 1
    %768 = vsyncpa [#allocation7], 1
    %s769 = scalar_lea.sflag [#allocation7], 1
    %770 = vsyncpa %s769, 1

</llo_original>
